<compile_context>
chip_gen: v7x
topology: tpu7x:2x2x1
jax: 0.10.0
libtpu: 0.0.40
codegen_flags: <defaults>
</compile_context>

<pallas_src>
import functools
import math

import jax
import jax.numpy as jnp
from jax.experimental import pallas as pl
from jax.experimental.pallas import tpu as pltpu

_LANE = 128


def _round_up(x, m):
    return ((x + m - 1) // m) * m


def _video_embedding_kernel(times_ref, ids_ref, w_ref, out_ref, *,
                            num_videos, num_frequencies):
    """One grid step handles TN samples.

    times_ref: VMEM f32[1, TN]    sample times (samples on the lane axis)
    ids_ref:   VMEM i32[1, TN]    video ids
    w_ref:     VMEM f32[V, D, C]  resident weights, C = 2F + 1 (native layout)
    out_ref:   VMEM f32[D, TN]    lane-dense output block
    """
    num_cols = 2 * num_frequencies + 1

    t = times_ref[...]                                    # (1, TN)
    ids = ids_ref[...]                                    # (1, TN)

    # Column -> (scale, offset) so that basis[c] = sin(scale_c * t + offset_c):
    #   c = 0      : scale 0,        offset pi/2  -> 1
    #   c = 2f + 1 : scale 2^f * pi, offset 0     -> sin(2^f * pi * t)
    #   c = 2f + 2 : scale 2^f * pi, offset pi/2  -> cos(2^f * pi * t)
    # Built from a 2-D iota in-kernel -> no captured array constants.
    c_idx = jax.lax.broadcasted_iota(jnp.int32, (num_cols, 1), 0)     # (C, 1)
    f_idx = jnp.right_shift(jnp.maximum(c_idx - 1, 0), 1)             # (C, 1)
    pow2 = jnp.left_shift(1, f_idx).astype(jnp.float32)               # 2^f
    scale = jnp.where(c_idx == 0, 0.0, pow2 * math.pi)                # (C, 1)
    offset = jnp.where((c_idx & 1) == 0, math.pi / 2.0, 0.0)          # (C, 1)
    basis = jnp.sin(scale * t + offset)                               # (C, TN)

    # One fused matmul per video on the masked basis; the select runs on the
    # small (C, TN) tile, accumulation stays in one f32 (D, TN) tensor.
    # TODO(synk): for large num_videos replace the static unroll + fully
    # resident weights with an MoE-style sort-by-video + scalar-prefetch group
    # offsets so each (D, C) slab is DMA'd once per group.
    acc = jnp.zeros(out_ref.shape, jnp.float32)
    for v in range(num_videos):                           # static unroll, V small
        basis_v = jnp.where(ids == v, basis, 0.0)                      # (C, TN)
        acc = acc + jnp.dot(w_ref[v], basis_v,
                            preferred_element_type=jnp.float32)        # (D, TN)
    out_ref[...] = acc


def _choose_tile(n):
    """Sample tile width: big (<= 2048) to amortize per-step overhead, but keep
    the grid >= 2 steps whenever possible so both v7x TensorCores get work."""
    tn = min(2048, _round_up(n, _LANE))
    if tn > _LANE and _round_up(n, tn) // tn < 2:
        tn = _round_up(tn // 2, _LANE)
    return tn


def video_embedding(times, video_ids, weights, num_frequencies):
    """times: (N,) f32, video_ids: (N,) int, weights: (V, D, 2F+1) f32 -> (N, D) f32."""
    N = times.shape[0]
    V, D, C = weights.shape
    F = num_frequencies
    assert C == 2 * F + 1 and F >= 1

    tn = _choose_tile(N)
    n_pad = _round_up(N, tn)
    pad = n_pad - N

    # Lane-dense (1, n_pad) inputs. Padded tail ids are -1 so padded samples
    # match no video and produce zeros (they are sliced off below anyway).
    times_2d = jnp.pad(times.astype(jnp.float32).reshape(1, N), ((0, 0), (0, pad)))
    ids_2d = jnp.pad(video_ids.astype(jnp.int32).reshape(1, N), ((0, 0), (0, pad)),
                     constant_values=-1)

    kernel = functools.partial(_video_embedding_kernel,
                               num_videos=V, num_frequencies=F)

    grid_spec = pltpu.PrefetchScalarGridSpec(
        num_scalar_prefetch=0,
        grid=(n_pad // tn,),
        in_specs=[
            pl.BlockSpec((1, tn), lambda i: (0, i)),        # times tile
            pl.BlockSpec((1, tn), lambda i: (0, i)),        # ids tile
            # Weights fully resident (constant index_map, native layout).
            # TODO(synk): single-buffer (pl.Buffered(1)) / bf16-cast this slab
            # and set vmem_limit_bytes once V*D*C grows toward the scoped VMEM
            # limit (half the headroom on v7x's 64 MiB VMEM).
            pl.BlockSpec((V, D, C), lambda i: (0, 0, 0)),
        ],
        out_specs=pl.BlockSpec((D, tn), lambda i: (0, i)),
    )

    out_dt = pl.pallas_call(
        kernel,
        grid_spec=grid_spec,
        out_shape=jax.ShapeDtypeStruct((D, n_pad), jnp.float32),
        compiler_params=pltpu.CompilerParams(
            dimension_semantics=("parallel",)),
    )(times_2d, ids_2d, weights.astype(jnp.float32))

    # Kernel emits the lane-dense (D, N) orientation; transpose once here.
    # (Consumers that can take (D, N) directly should skip this transpose.)
    return out_dt[:, :N].T


def video_embedding_ref(times, video_ids, weights, num_frequencies):
    """Pure-JAX reference with the original column layout [1 | sin/cos interleaved]."""
    F = num_frequencies
    f = jnp.arange(F, dtype=jnp.float32)
    phase = (jnp.exp2(f) * jnp.pi)[None, :] * times[:, None]          # (N, F)
    w = weights[video_ids]                                            # (N, D, C)
    out = w[:, :, 0]
    out = out + jnp.einsum('ndf,nf->nd', w[:, :, 1::2], jnp.sin(phase))
    out = out + jnp.einsum('ndf,nf->nd', w[:, :, 2::2], jnp.cos(phase))
    return out


if __name__ == "__main__":
    num_videos = 3
    num_frequencies = 4
    embedding_dim = 32
    N = 8

    key = jax.random.PRNGKey(0)
    k_w, k_t, k_id = jax.random.split(key, 3)

    # Deterministic parameter init (matches torch.nn.init.normal_ shape/dtype).
    weights = jax.random.normal(
        k_w, (num_videos, embedding_dim, 2 * num_frequencies + 1), dtype=jnp.float32)
    times = jax.random.uniform(k_t, (N,), dtype=jnp.float32)
    video_ids = jax.random.randint(k_id, (N,), 0, num_videos, dtype=jnp.int32)

    out = video_embedding(times, video_ids, weights, num_frequencies)
    out = jax.block_until_ready(out)

    ref = video_embedding_ref(times, video_ids, weights, num_frequencies)
    assert out.shape == (N, embedding_dim)
    assert jnp.allclose(out, ref, atol=1e-4, rtol=1e-4), "mismatch vs reference"

    print("KERNEL_OK")
</pallas_src>

<mosaic_0001>
module attributes {stable_mosaic.version = 11 : i64} {
  func.func @_video_embedding_kernel(%arg0: i32, %arg1: memref<1x128xf32, #tpu.memory_space<vmem>>, %arg2: memref<1x128xi32, #tpu.memory_space<vmem>>, %arg3: memref<3x32x9xf32, #tpu.memory_space<vmem>>, %arg4: memref<32x128xf32, #tpu.memory_space<vmem>>) attributes {dimension_semantics = [#tpu.dimension_semantics<parallel>], iteration_bounds = array<i64: 1>, scalar_prefetch = 0 : i64, scratch_operands = 0 : i64, tpu.core_type = #tpu.core_type<tc>, window_params = [{transform_indices = @transform_0, window_bounds = array<i64: 1, 128>}, {transform_indices = @transform_1, window_bounds = array<i64: 1, 128>}, {pipeline_mode = #tpu.pipeline_mode<synchronous>, transform_indices = @transform_2, window_bounds = array<i64: 3, 32, 9>}, {transform_indices = @transform_3, window_bounds = array<i64: 32, 128>}]} {
    %c0 = arith.constant 0 : index
    %c0_0 = arith.constant 0 : index
    %0 = vector.load %arg1[%c0, %c0_0] : memref<1x128xf32, #tpu.memory_space<vmem>>, vector<1x128xf32>
    %c0_1 = arith.constant 0 : index
    %c0_2 = arith.constant 0 : index
    %1 = vector.load %arg2[%c0_1, %c0_2] : memref<1x128xi32, #tpu.memory_space<vmem>>, vector<1x128xi32>
    %2 = tpu.iota {dimensions = array<i32: 0>} : vector<9x1xi32>
    %c1_i32 = arith.constant 1 : i32
    %3 = vector.broadcast %c1_i32 : i32 to vector<9x1xi32>
    %4 = arith.subi %2, %3 : vector<9x1xi32>
    %c0_i32 = arith.constant 0 : i32
    %5 = vector.broadcast %c0_i32 : i32 to vector<9x1xi32>
    %6 = arith.maxsi %4, %5 : vector<9x1xi32>
    %c1_i32_3 = arith.constant 1 : i32
    %7 = vector.broadcast %c1_i32_3 : i32 to vector<9x1xi32>
    %8 = arith.shrsi %6, %7 : vector<9x1xi32>
    %c1_i32_4 = arith.constant 1 : i32
    %9 = vector.broadcast %c1_i32_4 : i32 to vector<9x1xi32>
    %10 = arith.shli %9, %8 : vector<9x1xi32>
    %11 = arith.sitofp %10 : vector<9x1xi32> to vector<9x1xf32>
    %c0_i32_5 = arith.constant 0 : i32
    %12 = vector.broadcast %c0_i32_5 : i32 to vector<9x1xi32>
    %13 = arith.cmpi eq, %2, %12 : vector<9x1xi32>
    %cst = arith.constant 3.14159274 : f32
    %14 = vector.broadcast %cst : f32 to vector<9x1xf32>
    %15 = arith.mulf %11, %14 : vector<9x1xf32>
    %cst_6 = arith.constant 0.000000e+00 : f32
    %16 = vector.broadcast %cst_6 : f32 to vector<9x1xf32>
    %17 = arith.select %13, %16, %15 : vector<9x1xi1>, vector<9x1xf32>
    %c1_i32_7 = arith.constant 1 : i32
    %18 = vector.broadcast %c1_i32_7 : i32 to vector<9x1xi32>
    %19 = arith.andi %2, %18 : vector<9x1xi32>
    %c0_i32_8 = arith.constant 0 : i32
    %20 = vector.broadcast %c0_i32_8 : i32 to vector<9x1xi32>
    %21 = arith.cmpi eq, %19, %20 : vector<9x1xi32>
    %cst_9 = arith.constant 1.57079637 : f32
    %cst_10 = arith.constant 0.000000e+00 : f32
    %22 = vector.broadcast %cst_9 : f32 to vector<9x1xf32>
    %23 = vector.broadcast %cst_10 : f32 to vector<9x1xf32>
    %24 = arith.select %21, %22, %23 : vector<9x1xi1>, vector<9x1xf32>
    %25 = vector.broadcast %17 : vector<9x1xf32> to vector<9x128xf32>
    %26 = vector.broadcast %0 : vector<1x128xf32> to vector<9x128xf32>
    %27 = arith.mulf %25, %26 : vector<9x128xf32>
    %28 = vector.broadcast %24 : vector<9x1xf32> to vector<9x128xf32>
    %29 = arith.addf %27, %28 : vector<9x128xf32>
    %30 = math.sin %29 : vector<9x128xf32>
    %cst_11 = arith.constant 0.000000e+00 : f32
    %31 = vector.broadcast %cst_11 : f32 to vector<32x128xf32>
    %c0_i32_12 = arith.constant 0 : i32
    %32 = vector.broadcast %c0_i32_12 : i32 to vector<1x128xi32>
    %33 = arith.cmpi eq, %1, %32 : vector<1x128xi32>
    %cst_13 = arith.constant 0.000000e+00 : f32
    %34 = vector.shape_cast %33 : vector<1x128xi1> to vector<1x128xi1>
    %35 = vector.broadcast %34 : vector<1x128xi1> to vector<9x128xi1>
    %36 = vector.broadcast %cst_13 : f32 to vector<9x128xf32>
    %37 = arith.select %35, %30, %36 : vector<9x128xi1>, vector<9x128xf32>
    %c0_14 = arith.constant 0 : index
    %c0_15 = arith.constant 0 : index
    %c0_16 = arith.constant 0 : index
    %38 = vector.load %arg3[%c0_14, %c0_15, %c0_16] : memref<3x32x9xf32, #tpu.memory_space<vmem>>, vector<1x32x9xf32>
    %39 = vector.shape_cast %38 : vector<1x32x9xf32> to vector<32x9xf32>
    %cst_17 = arith.constant dense<0.000000e+00> : vector<32x128xf32>
    %40 = tpu.matmul %39, %37, %cst_17 {dimension_numbers = #tpu.dot_dimension_numbers<[1], [0], [0], [1], [0, 0, 1, 1], [], []>} : vector<32x9xf32>, vector<9x128xf32>, vector<32x128xf32> -> vector<32x128xf32>
    %41 = arith.addf %31, %40 : vector<32x128xf32>
    %c1_i32_18 = arith.constant 1 : i32
    %42 = vector.broadcast %c1_i32_18 : i32 to vector<1x128xi32>
    %43 = arith.cmpi eq, %1, %42 : vector<1x128xi32>
    %cst_19 = arith.constant 0.000000e+00 : f32
    %44 = vector.shape_cast %43 : vector<1x128xi1> to vector<1x128xi1>
    %45 = vector.broadcast %44 : vector<1x128xi1> to vector<9x128xi1>
    %46 = vector.broadcast %cst_19 : f32 to vector<9x128xf32>
    %47 = arith.select %45, %30, %46 : vector<9x128xi1>, vector<9x128xf32>
    %c1 = arith.constant 1 : index
    %c0_20 = arith.constant 0 : index
    %c0_21 = arith.constant 0 : index
    %48 = vector.load %arg3[%c1, %c0_20, %c0_21] : memref<3x32x9xf32, #tpu.memory_space<vmem>>, vector<1x32x9xf32>
    %49 = vector.shape_cast %48 : vector<1x32x9xf32> to vector<32x9xf32>
    %cst_22 = arith.constant dense<0.000000e+00> : vector<32x128xf32>
    %50 = tpu.matmul %49, %47, %cst_22 {dimension_numbers = #tpu.dot_dimension_numbers<[1], [0], [0], [1], [0, 0, 1, 1], [], []>} : vector<32x9xf32>, vector<9x128xf32>, vector<32x128xf32> -> vector<32x128xf32>
    %51 = arith.addf %41, %50 : vector<32x128xf32>
    %c2_i32 = arith.constant 2 : i32
    %52 = vector.broadcast %c2_i32 : i32 to vector<1x128xi32>
    %53 = arith.cmpi eq, %1, %52 : vector<1x128xi32>
    %cst_23 = arith.constant 0.000000e+00 : f32
    %54 = vector.shape_cast %53 : vector<1x128xi1> to vector<1x128xi1>
    %55 = vector.broadcast %54 : vector<1x128xi1> to vector<9x128xi1>
    %56 = vector.broadcast %cst_23 : f32 to vector<9x128xf32>
    %57 = arith.select %55, %30, %56 : vector<9x128xi1>, vector<9x128xf32>
    %c2 = arith.constant 2 : index
    %c0_24 = arith.constant 0 : index
    %c0_25 = arith.constant 0 : index
    %58 = vector.load %arg3[%c2, %c0_24, %c0_25] : memref<3x32x9xf32, #tpu.memory_space<vmem>>, vector<1x32x9xf32>
    %59 = vector.shape_cast %58 : vector<1x32x9xf32> to vector<32x9xf32>
    %cst_26 = arith.constant dense<0.000000e+00> : vector<32x128xf32>
    %60 = tpu.matmul %59, %57, %cst_26 {dimension_numbers = #tpu.dot_dimension_numbers<[1], [0], [0], [1], [0, 0, 1, 1], [], []>} : vector<32x9xf32>, vector<9x128xf32>, vector<32x128xf32> -> vector<32x128xf32>
    %61 = arith.addf %51, %60 : vector<32x128xf32>
    %c0_27 = arith.constant 0 : index
    %c0_28 = arith.constant 0 : index
    %62 = vector.load %arg4[%c0_27, %c0_28] : memref<32x128xf32, #tpu.memory_space<vmem>>, vector<32x128xf32>
    tpu.vector_store %arg4[%c0_27, %c0_28], %61 {strides = array<i32>} : memref<32x128xf32, #tpu.memory_space<vmem>>, vector<32x128xf32>,
    return
  }
  func.func @transform_0(%arg0: i32) -> (i32, i32) {
    %c0_i32 = arith.constant 0 : i32
    %c0_i32_0 = arith.constant 0 : i32
    return %c0_i32, %arg0 : i32, i32
  }
  func.func @transform_1(%arg0: i32) -> (i32, i32) {
    %c0_i32 = arith.constant 0 : i32
    %c0_i32_0 = arith.constant 0 : i32
    return %c0_i32, %arg0 : i32, i32
  }
  func.func @transform_2(%arg0: i32) -> (i32, i32, i32) {
    %c0_i32 = arith.constant 0 : i32
    %c0_i32_0 = arith.constant 0 : i32
    %c0_i32_1 = arith.constant 0 : i32
    %c0_i32_2 = arith.constant 0 : i32
    return %c0_i32, %c0_i32_0, %c0_i32_1 : i32, i32, i32
  }
  func.func @transform_3(%arg0: i32) -> (i32, i32) {
    %c0_i32 = arith.constant 0 : i32
    %c0_i32_0 = arith.constant 0 : i32
    return %c0_i32, %arg0 : i32, i32
  }
}

</mosaic_0001>

<llo_original>
// kernel: tpu_custom_call.1
$region0: #{tpu_custom_call.1}
  #allocation0 [shape = 'u32[]', space=smem, size = 0x4, offset = 0x4, fixed_abs, tag = 'smem constant byte address 0x4 - core index']
  #allocation1 [shape = 'u32[144,128]{1,0:T(1,128)}', space=vmem, size = 0x12000, scoped, tag = 'internal scratch']
  %s0 = inlined_call_operand.vmem [shape: f32[1,128], index: 0, kind: input, shape index: {}]
  %s1 = inlined_call_operand.vmem [shape: s32[1,128], index: 1, kind: input, shape index: {}]
  %s2 = inlined_call_operand.vmem [shape: f32[3,32,9], index: 2, kind: input, shape index: {}]
  %s3 = inlined_call_operand.hbm [shape: f32[32,128], index: 3, kind: output, shape index: {}]
  %s4 = sld [smem:[#allocation0]]
  $region22: #{tpu_custom_call.1} parent=0
    _
  %s6 = ssub.s32 1, %s4
  %s7 = scalar_select 0, %s6, %s4
  $region1: #{tpu_custom_call.1} parent=0
    #allocation2 [shape = 'u8[16384]{0}', space=vmem, size = 0x4000, scoped, tag = 'output window, operand 0, single buffered']
    #allocation3 [shape = 's32[1]{0}', space=sflag, size = 0x4, scoped, tag = 'scoped memory for tpu_custom_call.1']
    %8 = vsyncpa [#allocation3], 0
    // Predicated region
    $region2: #{tpu_custom_call.1} parent=1 // pred_check
      _
    $region3: #{tpu_custom_call.1} parent=1 // pred_check_branch
      %10 = sbr.rel (0) target = $region5
    $region4: #{tpu_custom_call.1} parent=1 // pred_region
      _
    $region5: #{tpu_custom_call.1} parent=1 // pred_fallthru
      _
    // Predicated region
    $region6: #{tpu_custom_call.1} parent=1 // pred_check
      _
    $region7: #{tpu_custom_call.1} parent=1 // pred_check_branch
      %12 = sbr.rel (0) target = $region9
    $region8: #{tpu_custom_call.1} parent=1 // pred_region
      _
    $region9: #{tpu_custom_call.1} parent=1 // pred_fallthru
      _
    // Predicated region
    $region10: #{tpu_custom_call.1} parent=1 // pred_check
      _
    $region11: #{tpu_custom_call.1} parent=1 // pred_check_branch
      %14 = sbr.rel (0) target = $region13
    $region12: #{tpu_custom_call.1} parent=1 // pred_region
      _
    $region13: #{tpu_custom_call.1} parent=1 // pred_fallthru
      _
    %v15 = vld [vmem:[%s0] sm:$0x1]
    %v16 = vld [vmem:[%s1] sm:$0x1]
    %v17 = vlaneseq
    %v18 = vshrl.u32 %v17, 7
    %v19 = vadd.s32 %v18, 8
    %v20 = vsub.s32 %v18, 1
    %v21 = vsub.s32 %v19, 1
    %vm22 = vcmp.gt.s32.totalorder %v20, 0
    %v23 = vsel %vm22, %v20, 0
    %vm24 = vcmp.gt.s32.totalorder %v21, 0
    %v25 = vsel %vm24, %v21, 0
    %v26 = vshra.s32 %v23, 1
    %v27 = vshra.s32 %v25, 1
    %v28 = vshll.u32 1, %v26
    %v29 = vshll.u32 1, %v27
    %v30 = vcvt.s32.f32 %v28
    %v31 = vcvt.s32.f32 %v29
    %vm32 = vcmp.eq.s32.totalorder %v18, 0
    %vm33 = vcmp.eq.s32.totalorder %v19, 0
    %v34 = vmul.f32 %v30, 3.1415927
    %v35 = vmul.f32 %v31, 3.1415927
    %v36 = vsel %vm32, 0.0, %v34
    %v37 = vsel %vm33, 0.0, %v35
    %v38 = vand.u32 %v18, 1
    %v39 = vand.u32 %v19, 1
    %vm40 = vcmp.eq.s32.totalorder %v38, 0
    %vm41 = vcmp.eq.s32.totalorder %v39, 0
    %v42 = vsel %vm40, 1.5707964, 0.0
    %v43 = vsel %vm41, 1.5707964, 0.0
    %v45 = vlaneseq
    %v46 = vshrl.u32 %v45, 7
    %v47 = vsub.s32 0, %v46
    %v48 = vrot.slane %v15, %v47
    %v50 = vmul.f32 %v36, %v48
    %v51 = vmul.f32 %v37, %v48
    %v52 = vadd.f32 %v50, %v42
    %v53 = vadd.f32 %v51, %v43
    %v54 = vand.u32 2147483647, %v52
    %vm55 = vcmp.le.f32.partialorder %v54, 0.7853982
    %vm56 = vcmp.lt.s32.totalorder %v52, 0
    %v57 = vand.u32 %v52, 2139095040
    %v58 = vshrl.u32 %v57, 23
    %v59 = vsub.s32 %v58, 127
    %v60 = vand.u32 2147483647, %v52
    %v61 = vand.u32 %v60, 8388607
    %v62 = vor.u32 %v61, 8388608
    %v63 = vsub.s32 0, %v62
    %v64 = vadd.s32 %v59, 1
    %vm65 = vcmp.gt.s32.totalorder %v64, 0
    %v66 = vsel %vm65, %v64, 0
    %v67 = vshrl.u32 %v66, 5
    %v68 = vand.u32 %v66, 31
    %v69 = vsub.s32 32, %v68
    %v70 = vshrl.u32 683565275, %v69
    %v71 = vshll.u32 683565275, %v68
    %v72 = vshrl.u32 2475754826, %v69
    %v73 = vor.u32 %v71, %v72
    %v74 = vshll.u32 2475754826, %v68
    %v75 = vshrl.u32 2131351028, %v69
    %v76 = vor.u32 %v74, %v75
    %v77 = vshll.u32 2131351028, %v68
    %v78 = vshrl.u32 2102212464, %v69
    %v79 = vor.u32 %v77, %v78
    %v80 = vshll.u32 2102212464, %v68
    %v81 = vshrl.u32 920167782, %v69
    %v82 = vor.u32 %v80, %v81
    %v83 = vshll.u32 920167782, %v68
    %v84 = vshrl.u32 1326507024, %v69
    %v85 = vor.u32 %v83, %v84
    %vm86 = vcmp.lt.s32.totalorder %v67, 1
    %vm87 = vcmp.lt.s32.totalorder %v67, 2
    %vm88 = vcmp.lt.s32.totalorder %v67, 3
    %vm89 = vcmp.lt.s32.totalorder %v67, 4
    %v90 = vsel %vm86, %v70, %v73
    %v91 = vsel %vm89, %v79, 2102212464
    %v92 = vsel %vm88, %v76, %v91
    %v93 = vsel %vm87, %v90, %v92
    %v94 = vsel %vm86, %v73, %v76
    %v95 = vsel %vm89, %v82, 920167782
    %v96 = vsel %vm88, %v79, %v95
    %v97 = vsel %vm87, %v94, %v96
    %v98 = vsel %vm86, %v76, %v79
    %v99 = vsel %vm89, %v85, 1326507024
    %v100 = vsel %vm88, %v82, %v99
    %v101 = vsel %vm87, %v98, %v100
    %v102 = vshll.u32 %v62, 8
    %v103 = vmul.u32.u64.compose %v102, %v101
    %v104 = vextract.low.u32 %v103
    %v105 = vextract.high.u32 %v103
    %v106 = vmul.u32.u64.compose %v102, %v97
    %v107 = vextract.low.u32 %v106
    %v108 = vextract.high.u32 %v106
    %v109 = vmul.u32 %v102, %v93
    %v110 = vadd.s32 %v105, %v107
    %vm111 = vc.u32 %v105, %v107
    %v112 = vadd.s32 %v108, 1
    %v113 = vsel %vm111, %v112, %v108
    %v114 = vadd.s32 %v109, %v113
    %v115 = vadd.s32 %v114, 536870912
    %v116 = vshrl.u32 %v115, 30
    %v117 = vshll.u32 %v116, 30
    %v118 = vsub.s32 %v114, %v117
    %vm119 = vcmp.lt.s32.totalorder %v118, 0
    %v120 = vsub.s32 0, %v118
    %v121 = vsel %vm119, %v120, %v118
    %v122 = vclz %v121
    %v123 = vsub.s32 %v122, 2
    %vm124 = vcmp.gt.s32.totalorder 0, %v123
    %v125 = vsel %vm124, 0, %v123
    %v126 = vsub.s32 32, %v125
    %v127 = vshll.u32 %v118, %v125
    %v128 = vshrl.u32 %v110, %v126
    %v129 = vor.u32 %v127, %v128
    %v130 = vsub.s32 4294967266, %v125
    %v131 = vadd.s32 %v130, 127
    %v132 = vshll.u32 %v131, 23
    %v133 = vor.u32 4788187, %v132
    %v134 = vand.u32 2147483647, %v133
    %v136 = vcvt.s32.f32 %v129
    %v137 = vmul.f32 %v136, %v134
    %v138 = vxor.u32 %v137, 2147483648
    %v139 = vsel %vm56, %v138, %v137
    %v140 = vsub.s32 4, %v116
    %v141 = vsel %vm56, %v140, %v116
    %v142 = vsel %vm55, %v52, %v139
    %v143 = vsel %vm55, 0, %v141
    %v144 = vcosq.f32.pop %v142
    %v145 = vsinq.f32.pop %v142
    %vm146 = vweird.f32 %v52
    %v147 = vadd.s32 %v143, 3
    %v148 = vand.u32 %v147, 3
    %vm149 = vcmp.lt.s32.totalorder %v148, 2
    %vm150 = vcmp.eq.s32.totalorder %v148, 0
    %v151 = vxor.u32 %v145, 2147483648
    %v152 = vsel %vm150, %v144, %v151
    %vm153 = vcmp.eq.s32.totalorder %v148, 2
    %v154 = vxor.u32 %v144, 2147483648
    %v155 = vsel %vm153, %v154, %v145
    %v156 = vsel %vm149, %v152, %v155
    %v157 = vsel %vm146, nan, %v156
    %v158 = vand.u32 2147483647, %v53
    %vm159 = vcmp.le.f32.partialorder %v158, 0.7853982
    %vm160 = vcmp.lt.s32.totalorder %v53, 0
    %v161 = vand.u32 %v53, 2139095040
    %v162 = vshrl.u32 %v161, 23
    %v163 = vsub.s32 %v162, 127
    %v164 = vand.u32 2147483647, %v53
    %v165 = vand.u32 %v164, 8388607
    %v166 = vor.u32 %v165, 8388608
    %v167 = vsub.s32 0, %v166
    %v168 = vadd.s32 %v163, 1
    %vm169 = vcmp.gt.s32.totalorder %v168, 0
    %v170 = vsel %vm169, %v168, 0
    %v171 = vshrl.u32 %v170, 5
    %v172 = vand.u32 %v170, 31
    %v173 = vsub.s32 32, %v172
    %v174 = vshrl.u32 683565275, %v173
    %v175 = vshll.u32 683565275, %v172
    %v176 = vshrl.u32 2475754826, %v173
    %v177 = vor.u32 %v175, %v176
    %v178 = vshll.u32 2475754826, %v172
    %v179 = vshrl.u32 2131351028, %v173
    %v180 = vor.u32 %v178, %v179
    %v181 = vshll.u32 2131351028, %v172
    %v182 = vshrl.u32 2102212464, %v173
    %v183 = vor.u32 %v181, %v182
    %v184 = vshll.u32 2102212464, %v172
    %v185 = vshrl.u32 920167782, %v173
    %v186 = vor.u32 %v184, %v185
    %v187 = vshll.u32 920167782, %v172
    %v188 = vshrl.u32 1326507024, %v173
    %v189 = vor.u32 %v187, %v188
    %vm190 = vcmp.lt.s32.totalorder %v171, 1
    %vm191 = vcmp.lt.s32.totalorder %v171, 2
    %vm192 = vcmp.lt.s32.totalorder %v171, 3
    %vm193 = vcmp.lt.s32.totalorder %v171, 4
    %v194 = vsel %vm190, %v174, %v177
    %v195 = vsel %vm193, %v183, 2102212464
    %v196 = vsel %vm192, %v180, %v195
    %v197 = vsel %vm191, %v194, %v196
    %v198 = vsel %vm190, %v177, %v180
    %v199 = vsel %vm193, %v186, 920167782
    %v200 = vsel %vm192, %v183, %v199
    %v201 = vsel %vm191, %v198, %v200
    %v202 = vsel %vm190, %v180, %v183
    %v203 = vsel %vm193, %v189, 1326507024
    %v204 = vsel %vm192, %v186, %v203
    %v205 = vsel %vm191, %v202, %v204
    %v206 = vshll.u32 %v166, 8
    %v207 = vmul.u32.u64.compose %v206, %v205
    %v208 = vextract.low.u32 %v207
    %v209 = vextract.high.u32 %v207
    %v210 = vmul.u32.u64.compose %v206, %v201
    %v211 = vextract.low.u32 %v210
    %v212 = vextract.high.u32 %v210
    %v213 = vmul.u32 %v206, %v197
    %v214 = vadd.s32 %v209, %v211
    %vm215 = vc.u32 %v209, %v211
    %v216 = vadd.s32 %v212, 1
    %v217 = vsel %vm215, %v216, %v212
    %v218 = vadd.s32 %v213, %v217
    %v219 = vadd.s32 %v218, 536870912
    %v220 = vshrl.u32 %v219, 30
    %v221 = vshll.u32 %v220, 30
    %v222 = vsub.s32 %v218, %v221
    %vm223 = vcmp.lt.s32.totalorder %v222, 0
    %v224 = vsub.s32 0, %v222
    %v225 = vsel %vm223, %v224, %v222
    %v226 = vclz %v225
    %v227 = vsub.s32 %v226, 2
    %vm228 = vcmp.gt.s32.totalorder 0, %v227
    %v229 = vsel %vm228, 0, %v227
    %v230 = vsub.s32 32, %v229
    %v231 = vshll.u32 %v222, %v229
    %v232 = vshrl.u32 %v214, %v230
    %v233 = vor.u32 %v231, %v232
    %v234 = vsub.s32 4294967266, %v229
    %v235 = vadd.s32 %v234, 127
    %v236 = vshll.u32 %v235, 23
    %v237 = vor.u32 4788187, %v236
    %v238 = vand.u32 2147483647, %v237
    %v240 = vcvt.s32.f32 %v233
    %v241 = vmul.f32 %v240, %v238
    %v242 = vxor.u32 %v241, 2147483648
    %v243 = vsel %vm160, %v242, %v241
    %v244 = vsub.s32 4, %v220
    %v245 = vsel %vm160, %v244, %v220
    %v246 = vsel %vm159, %v53, %v243
    %v247 = vsel %vm159, 0, %v245
    %v248 = vcosq.f32.pop %v246
    %v249 = vsinq.f32.pop %v246
    %vm250 = vweird.f32 %v53
    %v251 = vadd.s32 %v247, 3
    %v252 = vand.u32 %v251, 3
    %vm253 = vcmp.lt.s32.totalorder %v252, 2
    %vm254 = vcmp.eq.s32.totalorder %v252, 0
    %v255 = vxor.u32 %v249, 2147483648
    %v256 = vsel %vm254, %v248, %v255
    %vm257 = vcmp.eq.s32.totalorder %v252, 2
    %v258 = vxor.u32 %v248, 2147483648
    %v259 = vsel %vm257, %v258, %v249
    %v260 = vsel %vm253, %v256, %v259
    %v261 = vsel %vm250, nan, %v260
    %vm262 = vcmp.eq.s32.totalorder %v16, 0
    %v263 = vsel %vm262, 1, 0
    %v264 = vlaneseq
    %v265 = vshrl.u32 %v264, 7
    %v266 = vsub.s32 0, %v265
    %v267 = vrot.slane %v263, %v266
    %vm268 = vcmp.eq.s32.totalorder %v267, 1
    %v269 = vsel %vm268, %v157, 0.0
    %v270 = vsel %vm268, %v261, 0.0
    %v271 = vld [vmem:[%s2] sm:$0xff]
    %v272 = vld [vmem:[%s2 + $0x8] sm:$0xff]
    %v273 = vld [vmem:[%s2 + $0x10] sm:$0xff]
    %v274 = vld [vmem:[%s2 + $0x18] sm:$0xff]
    %vm275 = vcmp.eq.s32.totalorder %v16, 1
    %v276 = vsel %vm275, 1, 0
    %v277 = vlaneseq
    %v278 = vshrl.u32 %v277, 7
    %v279 = vsub.s32 0, %v278
    %v280 = vrot.slane %v276, %v279
    %vm281 = vcmp.eq.s32.totalorder %v280, 1
    %v282 = vsel %vm281, %v157, 0.0
    %v283 = vsel %vm281, %v261, 0.0
    %s284 = scalar_lea.vmem %s2, 32
    %v285 = vld [vmem:[%s284] sm:$0xff]
    %v286 = vld [vmem:[%s284 + $0x8] sm:$0xff]
    %v287 = vld [vmem:[%s284 + $0x10] sm:$0xff]
    %v288 = vld [vmem:[%s284 + $0x18] sm:$0xff]
    %vm289 = vcmask 72704
    %v291 = vsel %vm289, %v285, 0
    %v294 = vsel %vm289, %v286, 0
    %v297 = vsel %vm289, %v287, 0
    %v300 = vsel %vm289, %v288, 0
    %vm302 = vcmask 1040384
    %v304 = vsel %vm302, %v283, 0
    %306 = vmatprep.subr.mxu0 0.0
    %307 = vmatpush1.msra.mxu0 %v282
    %308 = vmatprep.subr.mxu0 0.0
    %309 = vmatpush1.msra.mxu0 %v304
    %310 = vmatprep.subr.mxu0 0.0
    %311 = vmatpush1.msra.mxu0 0.0
    %312 = vmatprep.subr.mxu0 0.0
    %313 = vmatpush1.msra.mxu0 0.0
    %314 = vmatprep.subr.mxu0 0.0
    %315 = vmatpush1.msra.mxu0 0.0
    %316 = vmatprep.subr.mxu0 0.0
    %317 = vmatpush1.msra.mxu0 0.0
    %318 = vmatprep.subr.mxu0 0.0
    %319 = vmatpush1.msra.mxu0 0.0
    %320 = vmatprep.subr.mxu0 0.0
    %321 = vmatpush1.msra.mxu0 0.0
    %322 = vmatprep.subr.mxu0 0.0
    %323 = vmatpush1.msra.mxu0 0.0
    %324 = vmatprep.subr.mxu0 0.0
    %325 = vmatpush1.msra.mxu0 0.0
    %326 = vmatprep.subr.mxu0 0.0
    %327 = vmatpush1.msra.mxu0 0.0
    %328 = vmatprep.subr.mxu0 0.0
    %329 = vmatpush1.msra.mxu0 0.0
    %330 = vmatprep.subr.mxu0 0.0
    %331 = vmatpush1.msra.mxu0 0.0
    %332 = vmatprep.subr.mxu0 0.0
    %333 = vmatpush1.msra.mxu0 0.0
    %334 = vmatprep.subr.mxu0 0.0
    %335 = vmatpush1.msra.mxu0 0.0
    %336 = vmatprep.subr.mxu0 0.0
    %337 = vmatpush1.msra.mxu0 0.0
    %338 = vmatprep.subr.mxu0 0.0
    %339 = vmatpush1.msra.mxu0 0.0
    %340 = vmatprep.subr.mxu0 0.0
    %341 = vmatpush1.msra.mxu0 0.0
    %342 = vmatprep.subr.mxu0 0.0
    %343 = vmatpush1.msra.mxu0 0.0
    %344 = vmatprep.subr.mxu0 0.0
    %345 = vmatpush1.msra.mxu0 0.0
    %346 = vmatprep.subr.mxu0 0.0
    %347 = vmatpush1.msra.mxu0 0.0
    %348 = vmatprep.subr.mxu0 0.0
    %349 = vmatpush1.msra.mxu0 0.0
    %350 = vmatprep.subr.mxu0 0.0
    %351 = vmatpush1.msra.mxu0 0.0
    %352 = vmatprep.subr.mxu0 0.0
    %353 = vmatpush1.msra.mxu0 0.0
    %354 = vmatprep.subr.mxu0 0.0
    %355 = vmatpush1.msra.mxu0 0.0
    %356 = vmatprep.subr.mxu0 0.0
    %357 = vmatpush1.msra.mxu0 0.0
    %358 = vmatprep.subr.mxu0 0.0
    %359 = vmatpush1.msra.mxu0 0.0
    %360 = vmatprep.subr.mxu0 0.0
    %361 = vmatpush1.msra.mxu0 0.0
    %362 = vmatprep.subr.mxu0 0.0
    %363 = vmatpush1.msra.mxu0 0.0
    %364 = vmatprep.subr.mxu0 0.0
    %365 = vmatpush1.msra.mxu0 0.0
    %366 = vmatprep.subr.mxu0 0.0
    %367 = vmatpush1.msra.mxu0 0.0
    %368 = vmatprep.subr.mxu0 0.0
    %369 = vmatpush1.msra.mxu0 0.0
    %370 = vmatprep.mubr.f32.mxu0 0.0
    %371 = vmatmul.mubr.f32.gmra.mrb[0].mxu0 %v291
    %v372 = vpop.f32.mrb[0].mxu0
    %v373 = vadd.f32 0.0, %v372
    %v374 = vpop.f32.mrb[0].mxu0
    %375 = vmatprep.mubr.f32.mxu0 0.0
    %376 = vmatmul.mubr.f32.gmra.mrb[0].mxu0 %v294
    %v377 = vpop.f32.mrb[0].mxu0
    %v378 = vadd.f32 0.0, %v377
    %v379 = vpop.f32.mrb[0].mxu0
    %380 = vmatprep.mubr.f32.mxu0 0.0
    %381 = vmatmul.mubr.f32.gmra.mrb[0].mxu0 %v297
    %v382 = vpop.f32.mrb[0].mxu0
    %v383 = vadd.f32 0.0, %v382
    %v384 = vpop.f32.mrb[0].mxu0
    %385 = vmatprep.mubr.f32.mxu0 0.0
    %386 = vmatmul.mubr.f32.gmra.mrb[0].mxu0 %v300
    %v387 = vpop.f32.mrb[0].mxu0
    %v388 = vadd.f32 0.0, %v387
    %v389 = vpop.f32.mrb[0].mxu0
    %390 = vdwg.mxu0
    %v392 = vsel %vm289, %v271, 0
    %v395 = vsel %vm289, %v272, 0
    %v398 = vsel %vm289, %v273, 0
    %v401 = vsel %vm289, %v274, 0
    %v404 = vsel %vm302, %v270, 0
    %406 = vmatprep.subr.mxu0 0.0
    %407 = vmatpush1.msra.mxu0 %v269
    %408 = vmatprep.subr.mxu0 0.0
    %409 = vmatpush1.msra.mxu0 %v404
    %410 = vmatprep.subr.mxu0 0.0
    %411 = vmatpush1.msra.mxu0 0.0
    %412 = vmatprep.subr.mxu0 0.0
    %413 = vmatpush1.msra.mxu0 0.0
    %414 = vmatprep.subr.mxu0 0.0
    %415 = vmatpush1.msra.mxu0 0.0
    %416 = vmatprep.subr.mxu0 0.0
    %417 = vmatpush1.msra.mxu0 0.0
    %418 = vmatprep.subr.mxu0 0.0
    %419 = vmatpush1.msra.mxu0 0.0
    %420 = vmatprep.subr.mxu0 0.0
    %421 = vmatpush1.msra.mxu0 0.0
    %422 = vmatprep.subr.mxu0 0.0
    %423 = vmatpush1.msra.mxu0 0.0
    %424 = vmatprep.subr.mxu0 0.0
    %425 = vmatpush1.msra.mxu0 0.0
    %426 = vmatprep.subr.mxu0 0.0
    %427 = vmatpush1.msra.mxu0 0.0
    %428 = vmatprep.subr.mxu0 0.0
    %429 = vmatpush1.msra.mxu0 0.0
    %430 = vmatprep.subr.mxu0 0.0
    %431 = vmatpush1.msra.mxu0 0.0
    %432 = vmatprep.subr.mxu0 0.0
    %433 = vmatpush1.msra.mxu0 0.0
    %434 = vmatprep.subr.mxu0 0.0
    %435 = vmatpush1.msra.mxu0 0.0
    %436 = vmatprep.subr.mxu0 0.0
    %437 = vmatpush1.msra.mxu0 0.0
    %438 = vmatprep.subr.mxu0 0.0
    %439 = vmatpush1.msra.mxu0 0.0
    %440 = vmatprep.subr.mxu0 0.0
    %441 = vmatpush1.msra.mxu0 0.0
    %442 = vmatprep.subr.mxu0 0.0
    %443 = vmatpush1.msra.mxu0 0.0
    %444 = vmatprep.subr.mxu0 0.0
    %445 = vmatpush1.msra.mxu0 0.0
    %446 = vmatprep.subr.mxu0 0.0
    %447 = vmatpush1.msra.mxu0 0.0
    %448 = vmatprep.subr.mxu0 0.0
    %449 = vmatpush1.msra.mxu0 0.0
    %450 = vmatprep.subr.mxu0 0.0
    %451 = vmatpush1.msra.mxu0 0.0
    %452 = vmatprep.subr.mxu0 0.0
    %453 = vmatpush1.msra.mxu0 0.0
    %454 = vmatprep.subr.mxu0 0.0
    %455 = vmatpush1.msra.mxu0 0.0
    %456 = vmatprep.subr.mxu0 0.0
    %457 = vmatpush1.msra.mxu0 0.0
    %458 = vmatprep.subr.mxu0 0.0
    %459 = vmatpush1.msra.mxu0 0.0
    %460 = vmatprep.subr.mxu0 0.0
    %461 = vmatpush1.msra.mxu0 0.0
    %462 = vmatprep.subr.mxu0 0.0
    %463 = vmatpush1.msra.mxu0 0.0
    %464 = vmatprep.subr.mxu0 0.0
    %465 = vmatpush1.msra.mxu0 0.0
    %466 = vmatprep.subr.mxu0 0.0
    %467 = vmatpush1.msra.mxu0 0.0
    %468 = vmatprep.subr.mxu0 0.0
    %469 = vmatpush1.msra.mxu0 0.0
    %470 = vmatprep.mubr.f32.mxu0 0.0
    %471 = vmatmul.mubr.f32.gmra.mrb[0].mxu0 %v392
    %v472 = vpop.f32.mrb[0].mxu0
    %v473 = vadd.f32 %v373, %v472
    %v474 = vpop.f32.mrb[0].mxu0
    %475 = vmatprep.mubr.f32.mxu0 0.0
    %476 = vmatmul.mubr.f32.gmra.mrb[0].mxu0 %v395
    %v477 = vpop.f32.mrb[0].mxu0
    %v478 = vadd.f32 %v378, %v477
    %v479 = vpop.f32.mrb[0].mxu0
    %480 = vmatprep.mubr.f32.mxu0 0.0
    %481 = vmatmul.mubr.f32.gmra.mrb[0].mxu0 %v398
    %v482 = vpop.f32.mrb[0].mxu0
    %v483 = vadd.f32 %v383, %v482
    %v484 = vpop.f32.mrb[0].mxu0
    %485 = vmatprep.mubr.f32.mxu0 0.0
    %486 = vmatmul.mubr.f32.gmra.mrb[0].mxu0 %v401
    %v487 = vpop.f32.mrb[0].mxu0
    %v488 = vadd.f32 %v388, %v487
    %v489 = vpop.f32.mrb[0].mxu0
    %490 = vdwg.mxu0
    %vm491 = vcmp.eq.s32.totalorder %v16, 2
    %v492 = vsel %vm491, 1, 0
    %v493 = vlaneseq
    %v494 = vshrl.u32 %v493, 7
    %v495 = vsub.s32 0, %v494
    %v496 = vrot.slane %v492, %v495
    %vm497 = vcmp.eq.s32.totalorder %v496, 1
    %v498 = vsel %vm497, %v157, 0.0
    %v499 = vsel %vm497, %v261, 0.0
    %s500 = scalar_lea.vmem %s2, 64
    %v501 = vld [vmem:[%s500] sm:$0xff]
    %v502 = vld [vmem:[%s500 + $0x8] sm:$0xff]
    %v503 = vld [vmem:[%s500 + $0x10] sm:$0xff]
    %v504 = vld [vmem:[%s500 + $0x18] sm:$0xff]
    %v506 = vsel %vm289, %v501, 0
    %v509 = vsel %vm289, %v502, 0
    %v512 = vsel %vm289, %v503, 0
    %v515 = vsel %vm289, %v504, 0
    %v518 = vsel %vm302, %v499, 0
    %520 = vmatprep.subr.mxu0 0.0
    %521 = vmatpush1.msra.mxu0 %v498
    %522 = vmatprep.subr.mxu0 0.0
    %523 = vmatpush1.msra.mxu0 %v518
    %524 = vmatprep.subr.mxu0 0.0
    %525 = vmatpush1.msra.mxu0 0.0
    %526 = vmatprep.subr.mxu0 0.0
    %527 = vmatpush1.msra.mxu0 0.0
    %528 = vmatprep.subr.mxu0 0.0
    %529 = vmatpush1.msra.mxu0 0.0
    %530 = vmatprep.subr.mxu0 0.0
    %531 = vmatpush1.msra.mxu0 0.0
    %532 = vmatprep.subr.mxu0 0.0
    %533 = vmatpush1.msra.mxu0 0.0
    %534 = vmatprep.subr.mxu0 0.0
    %535 = vmatpush1.msra.mxu0 0.0
    %536 = vmatprep.subr.mxu0 0.0
    %537 = vmatpush1.msra.mxu0 0.0
    %538 = vmatprep.subr.mxu0 0.0
    %539 = vmatpush1.msra.mxu0 0.0
    %540 = vmatprep.subr.mxu0 0.0
    %541 = vmatpush1.msra.mxu0 0.0
    %542 = vmatprep.subr.mxu0 0.0
    %543 = vmatpush1.msra.mxu0 0.0
    %544 = vmatprep.subr.mxu0 0.0
    %545 = vmatpush1.msra.mxu0 0.0
    %546 = vmatprep.subr.mxu0 0.0
    %547 = vmatpush1.msra.mxu0 0.0
    %548 = vmatprep.subr.mxu0 0.0
    %549 = vmatpush1.msra.mxu0 0.0
    %550 = vmatprep.subr.mxu0 0.0
    %551 = vmatpush1.msra.mxu0 0.0
    %552 = vmatprep.subr.mxu0 0.0
    %553 = vmatpush1.msra.mxu0 0.0
    %554 = vmatprep.subr.mxu0 0.0
    %555 = vmatpush1.msra.mxu0 0.0
    %556 = vmatprep.subr.mxu0 0.0
    %557 = vmatpush1.msra.mxu0 0.0
    %558 = vmatprep.subr.mxu0 0.0
    %559 = vmatpush1.msra.mxu0 0.0
    %560 = vmatprep.subr.mxu0 0.0
    %561 = vmatpush1.msra.mxu0 0.0
    %562 = vmatprep.subr.mxu0 0.0
    %563 = vmatpush1.msra.mxu0 0.0
    %564 = vmatprep.subr.mxu0 0.0
    %565 = vmatpush1.msra.mxu0 0.0
    %566 = vmatprep.subr.mxu0 0.0
    %567 = vmatpush1.msra.mxu0 0.0
    %568 = vmatprep.subr.mxu0 0.0
    %569 = vmatpush1.msra.mxu0 0.0
    %570 = vmatprep.subr.mxu0 0.0
    %571 = vmatpush1.msra.mxu0 0.0
    %572 = vmatprep.subr.mxu0 0.0
    %573 = vmatpush1.msra.mxu0 0.0
    %574 = vmatprep.subr.mxu0 0.0
    %575 = vmatpush1.msra.mxu0 0.0
    %576 = vmatprep.subr.mxu0 0.0
    %577 = vmatpush1.msra.mxu0 0.0
    %578 = vmatprep.subr.mxu0 0.0
    %579 = vmatpush1.msra.mxu0 0.0
    %580 = vmatprep.subr.mxu0 0.0
    %581 = vmatpush1.msra.mxu0 0.0
    %582 = vmatprep.subr.mxu0 0.0
    %583 = vmatpush1.msra.mxu0 0.0
    %584 = vmatprep.mubr.f32.mxu0 0.0
    %585 = vmatmul.mubr.f32.gmra.mrb[0].mxu0 %v506
    %v586 = vpop.f32.mrb[0].mxu0
    %v587 = vadd.f32 0.0, %v586
    %v588 = vpop.f32.mrb[0].mxu0
    %589 = vmatprep.mubr.f32.mxu0 0.0
    %590 = vmatmul.mubr.f32.gmra.mrb[0].mxu0 %v509
    %v591 = vpop.f32.mrb[0].mxu0
    %v592 = vadd.f32 0.0, %v591
    %v593 = vpop.f32.mrb[0].mxu0
    %594 = vmatprep.mubr.f32.mxu0 0.0
    %595 = vmatmul.mubr.f32.gmra.mrb[0].mxu0 %v512
    %v596 = vpop.f32.mrb[0].mxu0
    %v597 = vadd.f32 0.0, %v596
    %v598 = vpop.f32.mrb[0].mxu0
    %599 = vmatprep.mubr.f32.mxu0 0.0
    %600 = vmatmul.mubr.f32.gmra.mrb[0].mxu0 %v515
    %v601 = vpop.f32.mrb[0].mxu0
    %v602 = vadd.f32 0.0, %v601
    %v603 = vpop.f32.mrb[0].mxu0
    %604 = vdwg.mxu0
    %v605 = vadd.f32 %v473, %v587
    %v606 = vadd.f32 %v478, %v592
    %v607 = vadd.f32 %v483, %v597
    %v608 = vadd.f32 %v488, %v602
    %609 = vst [vmem:[#allocation2] sm:$0xff] %v605
    %610 = vst [vmem:[#allocation2 + $0x8] sm:$0xff] %v606
    %611 = vst [vmem:[#allocation2 + $0x10] sm:$0xff] %v607
    %612 = vst [vmem:[#allocation2 + $0x18] sm:$0xff] %v608
    // Predicated region
    $region14: #{tpu_custom_call.1} parent=1 // pred_check
      _
    $region15: #{tpu_custom_call.1} parent=1 // pred_check_branch
      %614 = sbr.rel (0) target = $region17
    $region16: #{tpu_custom_call.1} parent=1 // pred_region
      %s616 = ssub.s32 512, 512
      %617 = vsyncadd [#allocation3], %s616
      %s618 = sshll.u32 [#allocation2], 4
      %s619 = int_to_ptr.vmem [resolvable:$true] %s618
      %624 = dma.vmem_to_hbm [thread:$0]  %s619, 512, %s3, [#allocation3], 128, 128, 8
    $region17: #{tpu_custom_call.1} parent=1 // pred_fallthru
      _
    // Predicated region
    $region18: #{tpu_custom_call.1} parent=1 // pred_check
      _
    $region19: #{tpu_custom_call.1} parent=1 // pred_check_branch
      %626 = sbr.rel (0) target = $region21
    $region20: #{tpu_custom_call.1} parent=1 // pred_region
      %627 = dma.done [#allocation3], 512
    $region21: #{tpu_custom_call.1} parent=1 // pred_fallthru
      _
    %628 = vsyncpa [#allocation3], 1

</llo_original>
